<compile_context>
chip_gen: v5e
topology: v5e:2x2
jax: 0.10.0
libtpu: 0.0.40
codegen_flags: <defaults>
</compile_context>

<pallas_src>
import jax
import jax.numpy as jnp
from jax.experimental import pallas as pl
from jax.experimental.pallas import tpu as pltpu


def _actnorm_kernel(p_ref, x_ref, o_ref):
    """Per-row affine: o = x * scale + bias (bias = scale * loc).

    p_ref: (ROW_TILE, 2) f32  -- col 0 = scale, col 1 = scale * loc
    x_ref: (ROW_TILE, HW_TILE)
    o_ref: (ROW_TILE, HW_TILE)
    """
    s = p_ref[:, 0:1]
    b = p_ref[:, 1:2]
    o_ref[...] = (x_ref[...] * s + b).astype(o_ref.dtype)


def _cdiv(a, b):
    return -(-a // b)


def _hw_budget():
    """(target_block_bytes, vmem_limit_bytes) derived from the chip's VMEM."""
    vmem_cap = 64 * 1024 * 1024  # conservative default (v7x-sized VMEM)
    try:
        info = pltpu.get_tpu_info()
        vmem_cap = int(getattr(info, "vmem_capacity_bytes", vmem_cap))
    except Exception:
        pass
    if vmem_cap <= 64 * 1024 * 1024:
        # v7x-class: 64 MiB physical VMEM -> ~6 MiB blocks, 48 MiB scoped limit
        # (2x in + 2x out double-buffered ~= 24 MiB, comfortably inside).
        return 6 * 1024 * 1024, 48 * 1024 * 1024
    # v5e/v6e-class: 128 MiB physical VMEM -> ~4 MiB blocks; set the scoped
    # limit explicitly above v5e's 16 MiB default so larger blocks never trip
    # the scoped-VMEM cliff.
    return 4 * 1024 * 1024, 40 * 1024 * 1024


def _divisor_tile(dim, base, cap):
    """Largest multiple of `base` <= cap that divides `dim`.  If none exists,
    right-size to the array (rounded up to `base`) instead of returning an
    oversized, mostly-masked block."""
    cap = max(base, (cap // base) * base)
    for t in range(cap, base - 1, -base):
        if dim % t == 0:
            return t
    return min(cap, base * _cdiv(dim, base))


def _pick_tiles(nrows, hw, itemsize, target_block_bytes):
    """Lane-dense tiles sized to ~target_block_bytes per input block."""
    # Prefer growing the lane dimension first so each per-row DMA run stays
    # long and contiguous.
    lane_cap = 4096 if target_block_bytes >= 4 * 1024 * 1024 else 2048
    sublane_base = max(8, 32 // max(1, itemsize))     # 8 f32, 16 bf16, 32 int8

    hw_tile = hw if hw <= lane_cap else _divisor_tile(hw, 128, lane_cap)
    row_cap = max(sublane_base,
                  target_block_bytes // max(1, hw_tile * itemsize))
    row_tile = (nrows if nrows <= row_cap
                else _divisor_tile(nrows, sublane_base, row_cap))

    # Megacore: v7x has 2 TensorCores -- make sure at least one "parallel"
    # grid axis has >= 2 blocks so both cores get work.
    if _cdiv(nrows, row_tile) < 2 and _cdiv(hw, hw_tile) < 2:
        if nrows >= 2 * sublane_base:
            half = sublane_base * _cdiv(_cdiv(nrows, 2), sublane_base)
            row_tile = min(row_tile, max(sublane_base, half))
        elif hw >= 2 * 128:
            half = 128 * _cdiv(_cdiv(hw, 2), 128)
            hw_tile = min(hw_tile, max(128, half))
    return row_tile, hw_tile


def actnorm_forward(x, loc, scale, logdet=False, *,
                    min_pallas_bytes=2 * 1024 * 1024, donate_x=False):
    """ActNorm forward (eval / already-initialized path).

    x:     (N, C, H, W) or (N, C)    (NCHW like the PyTorch module)
    loc:   (1, C, 1, 1)
    scale: (1, C, 1, 1)
    min_pallas_bytes: inputs smaller than this use the plain-XLA fallback
                      (launch overhead dominates for tiny tensors).
    donate_x: alias x's buffer to the output inside the pallas_call (use when
              the caller can donate x; saves one N*C*H*W HBM allocation).
    """
    squeeze = (x.ndim == 2)
    if squeeze:
        N, C = x.shape
        H = W = 1
    else:
        N, C, H, W = x.shape
    HW = H * W

    scale_c = scale.reshape(C).astype(jnp.float32)
    loc_c = loc.reshape(C).astype(jnp.float32)

    itemsize = jnp.dtype(x.dtype).itemsize
    total_bytes = N * C * HW * itemsize

    if squeeze or HW < 128 or total_bytes < min_pallas_bytes:
        # Lane-sparse spatial dim or tiny tensor: a Pallas launch would be
        # dominated by custom-call / pipeline-prologue overhead (or masked
        # 1-of-128-lane stores); plain XLA fusion is strictly better.
        h4 = (scale_c.reshape(1, C, 1, 1)
              * (x.reshape(N, C, H, W).astype(jnp.float32)
                 + loc_c.reshape(1, C, 1, 1))).astype(x.dtype)
        h = h4[:, :, 0, 0] if squeeze else h4
    else:
        nrows = N * C
        x_r = x.reshape(nrows, HW)

        # Fused per-row params: h = scale * x + (scale * loc).  Tiny.
        params = jnp.stack(
            [jnp.tile(scale_c, N), jnp.tile(scale_c * loc_c, N)],
            axis=-1)                                  # (nrows, 2) f32

        target_block_bytes, vmem_limit = _hw_budget()
        row_tile, hw_tile = _pick_tiles(nrows, HW, itemsize,
                                        target_block_bytes)
        grid = (_cdiv(nrows, row_tile), _cdiv(HW, hw_tile))

        cost = pl.CostEstimate(
            flops=2 * nrows * HW,
            transcendentals=0,
            bytes_accessed=2 * nrows * HW * itemsize + params.size * 4,
        )

        h_r = pl.pallas_call(
            _actnorm_kernel,
            out_shape=jax.ShapeDtypeStruct((nrows, HW), x.dtype),
            grid_spec=pltpu.PrefetchScalarGridSpec(
                num_scalar_prefetch=0,
                grid=grid,
                in_specs=[
                    pl.BlockSpec((row_tile, 2), lambda r, c: (r, 0)),
                    pl.BlockSpec((row_tile, hw_tile), lambda r, c: (r, c)),
                ],
                out_specs=pl.BlockSpec((row_tile, hw_tile),
                                       lambda r, c: (r, c)),
            ),
            compiler_params=pltpu.CompilerParams(
                dimension_semantics=("parallel", "parallel"),
                vmem_limit_bytes=vmem_limit),
            cost_estimate=cost,
            input_output_aliases=({1: 0} if donate_x else {}),
        )(params, x_r)
        h = h_r.reshape(N, C, H, W)

    if logdet:
        log_abs = jnp.log(jnp.abs(scale_c))
        ld = ((H * W) * jnp.sum(log_abs)
              * jnp.ones((N,), dtype=jnp.float32)).astype(x.dtype)
        return h, ld
    return h


def _reference(x, loc, scale, logdet=False):
    h = scale * (x + loc)
    if logdet:
        _, _, H, W = x.shape
        ld = (H * W * jnp.sum(jnp.log(jnp.abs(scale)))
              * jnp.ones((x.shape[0],), dtype=x.dtype))
        return h, ld
    return h


if __name__ == "__main__":
    key = jax.random.PRNGKey(0)
    k_x, k_loc, k_scale = jax.random.split(key, 3)

    N, C, H, W = 2, 4, 16, 16
    x = jax.random.normal(k_x, (N, C, H, W), dtype=jnp.float32)

    # Parameter shapes from __init__: loc (1,C,1,1) zeros, scale (1,C,1,1)
    # ones; perturb deterministically so the kernel is exercised non-trivially.
    loc = 0.1 * jax.random.normal(k_loc, (1, C, 1, 1), dtype=jnp.float32)
    scale = 1.0 + 0.1 * jax.random.normal(k_scale, (1, C, 1, 1),
                                          dtype=jnp.float32)

    h_ref, ld_ref = _reference(x, loc, scale, logdet=True)

    # 1) Force the Pallas path on the small demo shape (bypass disabled).
    h, ld = actnorm_forward(x, loc, scale, logdet=True, min_pallas_bytes=0)
    jax.block_until_ready((h, ld))
    assert jnp.allclose(h, h_ref, atol=1e-5, rtol=1e-5), "pallas output mismatch"
    assert jnp.allclose(ld, ld_ref, atol=1e-5, rtol=1e-5), "logdet mismatch"

    # 2) Default path: tiny input triggers the XLA-fallback bypass.
    h_b = actnorm_forward(x, loc, scale, logdet=False)
    jax.block_until_ready(h_b)
    assert jnp.allclose(h_b, h_ref, atol=1e-5, rtol=1e-5), "bypass mismatch"

    # 3) Non-128-aligned spatial size exercises the right-sized boundary block
    #    and the megacore lane split (Pallas forced; still a small tensor).
    x3 = jax.random.normal(k_x, (N, C, 20, 20), dtype=jnp.float32)
    h3 = actnorm_forward(x3, loc, scale, logdet=False, min_pallas_bytes=0)
    jax.block_until_ready(h3)
    h3_ref = _reference(x3, loc, scale)
    assert jnp.allclose(h3, h3_ref, atol=1e-5, rtol=1e-5), "masked-block mismatch"

    # 4) 2-D squeeze path (handled with plain jnp, per the module semantics).
    x2 = jax.random.normal(k_x, (N, C), dtype=jnp.float32)
    h2 = actnorm_forward(x2, loc, scale, logdet=False)
    jax.block_until_ready(h2)
    h2_ref = (scale * (x2[:, :, None, None] + loc))[:, :, 0, 0]
    assert jnp.allclose(h2, h2_ref, atol=1e-5, rtol=1e-5), "2-D output mismatch"

    print("KERNEL_OK")
</pallas_src>

<mosaic_0001>
module attributes {stable_mosaic.version = 11 : i64} {
  func.func @_actnorm_kernel(%arg0: i32, %arg1: i32, %arg2: memref<8x2xf32, #tpu.memory_space<vmem>>, %arg3: memref<8x128xf32, #tpu.memory_space<vmem>>, %arg4: memref<8x128xf32, #tpu.memory_space<vmem>>) attributes {dimension_semantics = [#tpu.dimension_semantics<parallel>, #tpu.dimension_semantics<parallel>], iteration_bounds = array<i64: 1, 2>, scalar_prefetch = 0 : i64, scratch_operands = 0 : i64, tpu.core_type = #tpu.core_type<tc>, window_params = [{transform_indices = @transform_0, window_bounds = array<i64: 8, 2>}, {transform_indices = @transform_1, window_bounds = array<i64: 8, 128>}, {transform_indices = @transform_2, window_bounds = array<i64: 8, 128>}]} {
    %c0 = arith.constant 0 : index
    %c0_0 = arith.constant 0 : index
    %0 = vector.load %arg2[%c0, %c0_0] : memref<8x2xf32, #tpu.memory_space<vmem>>, vector<8x1xf32>
    %c0_1 = arith.constant 0 : index
    %c1 = arith.constant 1 : index
    %1 = vector.load %arg2[%c0_1, %c1] : memref<8x2xf32, #tpu.memory_space<vmem>>, vector<8x1xf32>
    %c0_2 = arith.constant 0 : index
    %c0_3 = arith.constant 0 : index
    %2 = vector.load %arg3[%c0_2, %c0_3] : memref<8x128xf32, #tpu.memory_space<vmem>>, vector<8x128xf32>
    %3 = vector.broadcast %0 : vector<8x1xf32> to vector<8x128xf32>
    %4 = arith.mulf %2, %3 : vector<8x128xf32>
    %5 = vector.broadcast %1 : vector<8x1xf32> to vector<8x128xf32>
    %6 = arith.addf %4, %5 : vector<8x128xf32>
    %c0_4 = arith.constant 0 : index
    %c0_5 = arith.constant 0 : index
    %7 = vector.load %arg4[%c0_4, %c0_5] : memref<8x128xf32, #tpu.memory_space<vmem>>, vector<8x128xf32>
    tpu.vector_store %arg4[%c0_4, %c0_5], %6 {strides = array<i32>} : memref<8x128xf32, #tpu.memory_space<vmem>>, vector<8x128xf32>,
    return
  }
  func.func @transform_0(%arg0: i32, %arg1: i32) -> (i32, i32) {
    %c0_i32 = arith.constant 0 : i32
    %c0_i32_0 = arith.constant 0 : i32
    return %arg0, %c0_i32 : i32, i32
  }
  func.func @transform_1(%arg0: i32, %arg1: i32) -> (i32, i32) {
    %c0_i32 = arith.constant 0 : i32
    return %arg0, %arg1 : i32, i32
  }
  func.func @transform_2(%arg0: i32, %arg1: i32) -> (i32, i32) {
    %c0_i32 = arith.constant 0 : i32
    return %arg0, %arg1 : i32, i32
  }
}

</mosaic_0001>

<llo_original>
// kernel: tpu_custom_call.1
$region0: #{tpu_custom_call.1}
  #allocation0 [shape = 'u32[]', space=smem, size = 0x4, offset = 0x4, fixed_abs, tag = 'smem constant byte address 0x4 - core index']
  #allocation1 [shape = 'u32[72,128]{1,0:T(1,128)}', space=vmem, size = 0x9000, scoped, tag = 'internal scratch']
  %s0 = inlined_call_operand.vmem [shape: f32[8,2], index: 0, kind: input, shape index: {}]
  %s1 = inlined_call_operand.hbm [shape: f32[8,256], index: 1, kind: input, shape index: {}]
  %s2 = inlined_call_operand.hbm [shape: f32[8,256], index: 2, kind: output, shape index: {}]
  %s3 = sld [smem:[#allocation0]]
  $region45: #{tpu_custom_call.1} parent=0
    _
  %s5 = ssub.s32 1, %s3
  %s6 = scalar_select 0, %s5, %s3
  $region1: #{tpu_custom_call.1} parent=0
    #allocation2 [shape = 'u8[8192]{0}', space=vmem, size = 0x2000, scoped, tag = 'input window, operand 1']
    #allocation3 [shape = 's32[2]{0}', space=sflag, size = 0x8, scoped, tag = 'scoped memory for tpu_custom_call.1']
    #allocation4 [shape = 's32[2]{0}', space=sflag, size = 0x8, scoped, tag = 'scoped memory for tpu_custom_call.1']
    #allocation5 [shape = 'u8[8192]{0}', space=vmem, size = 0x2000, scoped, tag = 'output window, operand 0']
    %7 = vsyncpa [#allocation3], 0
    %s8 = scalar_lea.sflag [#allocation3], 1
    %9 = vsyncpa %s8, 0
    %10 = vsyncpa [#allocation4], 0
    %s11 = scalar_lea.sflag [#allocation4], 1
    %12 = vsyncpa %s11, 0
    loop: start=0, step=1, limit=4
    $region2: #{tpu_custom_call.1} parent=1 // loop_pre_header
      _
    $region3: #{tpu_custom_call.1} parent=1 // loop_header
      %s14 = sphi 0, %s18
      %p15 = scmp.ge.s32.totalorder %s14, 4
      %s21 = sphi 0, %s33
      %s22 = sphi 0, %s29
      %s23 = sphi 0, %s21
      %s24 = sphi 0, %s22
      %s25 = sphi 0, %s23
      %s26 = sphi 0, %s24
      %s36 = sphi 0, %s38
      %s39 = sphi 0, %s36
      %s40 = sphi 0, %s39
      %s56 = sphi 0, %s40
      %s64 = sphi 0, %s66
      %s67 = sphi 0, %s64
      %s68 = sphi 0, %s67
      %s84 = sphi 0, %s68
      %s92 = sphi 0, %s94
      %s95 = sphi 0, %s92
      %s96 = sphi 0, %s95
      %s112 = sphi 0, %s96
    $region4: #{tpu_custom_call.1} parent=1 // loop_header_branch
      %17 = sbr.rel (%p15) target = $region8
    $region5: #{tpu_custom_call.1} parent=1 // loop_body
      %s19 = ssub.s32 %s14, 1
      %s20 = ssub.s32 %s14, 2
      %s27 = sadd.s32 1, %s22
      %p28 = scmp.ge.s32.totalorder %s27, 2
      %s29 = scalar_select %p28, 0, %s27
      %s30 = sadd.s32 1, %s21
      %s31 = scalar_select %p28, %s30, %s21
      %p32 = scmp.ge.s32.totalorder %s31, 1
      %s33 = scalar_select %p32, 0, %s31
      %s34 = ssub.s32 %s21, %s33
      %p35 = scmp.eq.s32.totalorder %s34, 0
      %s37 = sadd.s32 %s36, 1
      %s38 = scalar_select %p35, %s36, %s37
      %p41 = pneg %p35
      %p42 = scmp.eq.s32.totalorder %s14, 1
      %p43 = por %p41, %p42
      %p44 = scmp.ne.s32.totalorder %s36, %s39
      %p45 = scmp.eq.s32.totalorder %s14, 0
      %p46 = por %p44, %p45
      %p47 = scmp.ne.s32.totalorder %s36, %s39
      %p48 = scmp.eq.s32.totalorder %s19, 1
      %p49 = por %p47, %p48
      %p50 = scmp.ne.s32.totalorder %s39, %s40
      %p51 = scmp.eq.s32.totalorder %s19, 0
      %p52 = por %p50, %p51
      %p53 = scmp.ne.s32.totalorder %s39, %s40
      %p54 = scmp.eq.s32.totalorder %s20, 1
      %p55 = por %p53, %p54
      %p57 = scmp.ne.s32.totalorder %s40, %s56
      %p58 = scmp.eq.s32.totalorder %s20, 0
      %p59 = por %p57, %p58
      %s60 = ssub.s32 %s21, %s33
      %s61 = ssub.s32 %s22, %s29
      %s62 = sor.u32 %s60, %s61
      %p63 = scmp.eq.s32.totalorder %s62, 0
      %s65 = sadd.s32 %s64, 1
      %s66 = scalar_select %p63, %s64, %s65
      %p69 = pneg %p63
      %p70 = scmp.eq.s32.totalorder %s14, 1
      %p71 = por %p69, %p70
      %p72 = scmp.ne.s32.totalorder %s64, %s67
      %p73 = scmp.eq.s32.totalorder %s14, 0
      %p74 = por %p72, %p73
      %p75 = scmp.ne.s32.totalorder %s64, %s67
      %p76 = scmp.eq.s32.totalorder %s19, 1
      %p77 = por %p75, %p76
      %p78 = scmp.ne.s32.totalorder %s67, %s68
      %p79 = scmp.eq.s32.totalorder %s19, 0
      %p80 = por %p78, %p79
      %p81 = scmp.ne.s32.totalorder %s67, %s68
      %p82 = scmp.eq.s32.totalorder %s20, 1
      %p83 = por %p81, %p82
      %p85 = scmp.ne.s32.totalorder %s68, %s84
      %p86 = scmp.eq.s32.totalorder %s20, 0
      %p87 = por %p85, %p86
      %s88 = ssub.s32 %s21, %s33
      %s89 = ssub.s32 %s22, %s29
      %s90 = sor.u32 %s88, %s89
      %p91 = scmp.eq.s32.totalorder %s90, 0
      %s93 = sadd.s32 %s92, 1
      %s94 = scalar_select %p91, %s92, %s93
      %p97 = pneg %p91
      %p98 = scmp.eq.s32.totalorder %s14, 1
      %p99 = por %p97, %p98
      %p100 = scmp.ne.s32.totalorder %s92, %s95
      %p101 = scmp.eq.s32.totalorder %s14, 0
      %p102 = por %p100, %p101
      %p103 = scmp.ne.s32.totalorder %s92, %s95
      %p104 = scmp.eq.s32.totalorder %s19, 1
      %p105 = por %p103, %p104
      %p106 = scmp.ne.s32.totalorder %s95, %s96
      %p107 = scmp.eq.s32.totalorder %s19, 0
      %p108 = por %p106, %p107
      %p109 = scmp.ne.s32.totalorder %s95, %s96
      %p110 = scmp.eq.s32.totalorder %s20, 1
      %p111 = por %p109, %p110
      %p113 = scmp.ne.s32.totalorder %s96, %s112
      %p114 = scmp.eq.s32.totalorder %s20, 0
      %p115 = por %p113, %p114
      %p116 = scmp.le.s32.totalorder 1, %s14
      %p117 = scmp.lt.s32.totalorder %s14, 3
      %p118 = pnand %p116, %p117
      %p119 = pneg %p118
      // Predicated region
      $region9: #{tpu_custom_call.1} parent=5 // pred_check
        _
      $region10: #{tpu_custom_call.1} parent=5 // pred_check_branch
        %121 = sbr.rel (%p118) target = $region12
      $region11: #{tpu_custom_call.1} parent=5 // pred_region
        %s122 = ssub.s32 %s14, 1
        // Predicated region
        $region13: #{tpu_custom_call.1} parent=11 // pred_check
          %p123 = pneg %p52
        $region14: #{tpu_custom_call.1} parent=11 // pred_check_branch
          %125 = sbr.rel (%p123) target = $region16
        $region15: #{tpu_custom_call.1} parent=11 // pred_region
          %p126 = scmp.lt.s32.totalorder %s23, 0
          %s127 = scalar_select %p126, %s23, 0
          %s128 = smul.addr %s127, 8
          %s129 = scalar_lea.vmem %s0, %s128
        $region16: #{tpu_custom_call.1} parent=11 // pred_fallthru
          _
      $region12: #{tpu_custom_call.1} parent=5 // pred_fallthru
        _
      %p130 = scmp.lt.s32.totalorder %s14, 2
      // Predicated region
      $region17: #{tpu_custom_call.1} parent=5 // pred_check
        %p131 = pneg %p130
      $region18: #{tpu_custom_call.1} parent=5 // pred_check_branch
        %133 = sbr.rel (%p131) target = $region20
      $region19: #{tpu_custom_call.1} parent=5 // pred_region
        // Predicated region
        $region21: #{tpu_custom_call.1} parent=19 // pred_check
          %p134 = pneg %p74
        $region22: #{tpu_custom_call.1} parent=19 // pred_check_branch
          %136 = sbr.rel (%p134) target = $region24
        $region23: #{tpu_custom_call.1} parent=19 // pred_region
          %s137 = sand.u32 %s64, 1
          %s138 = scalar_lea.sflag [#allocation3], %s137
          %s139 = sand.u32 %s64, 1
          %s140 = smul.addr %s139, 8
          %s141 = scalar_lea.vmem [#allocation2], %s140
          %143 = vsyncadd %s138, 0
          %s144 = smul.addr %s21, 2
          %s145 = sadd.s32 %s22, %s144
          %s146 = smul.addr %s145, 8
          %s147 = scalar_lea.hbm %s1, %s146
          %s149 = sshll.u32 %s147, 4
          %s150 = int_to_ptr.hbm [resolvable:$true] %s149
          %s151 = sshll.u32 %s141, 4
          %s152 = int_to_ptr.vmem [resolvable:$true] %s151
          %154 = dma.hbm_to_vmem [thread:$0]  %s150, 128, %s152, %s138
        $region24: #{tpu_custom_call.1} parent=19 // pred_fallthru
          _
      $region20: #{tpu_custom_call.1} parent=5 // pred_fallthru
        _
      %p155 = scmp.le.s32.totalorder 1, %s14
      %p156 = scmp.lt.s32.totalorder %s14, 3
      %p157 = pnand %p155, %p156
      %p158 = pneg %p157
      // Predicated region
      $region25: #{tpu_custom_call.1} parent=5 // pred_check
        _
      $region26: #{tpu_custom_call.1} parent=5 // pred_check_branch
        %160 = sbr.rel (%p157) target = $region28
      $region27: #{tpu_custom_call.1} parent=5 // pred_region
        %s161 = ssub.s32 %s14, 1
        %s162 = sand.u32 %s67, 1
        %s163 = scalar_lea.sflag [#allocation3], %s162
        %s164 = sand.u32 %s67, 1
        %s165 = smul.addr %s164, 8
        %s166 = scalar_lea.vmem [#allocation2], %s165
        // Predicated region
        $region29: #{tpu_custom_call.1} parent=27 // pred_check
          %p167 = pneg %p80
        $region30: #{tpu_custom_call.1} parent=27 // pred_check_branch
          %169 = sbr.rel (%p167) target = $region32
        $region31: #{tpu_custom_call.1} parent=27 // pred_region
          %171 = dma.done %s163, 128
        $region32: #{tpu_custom_call.1} parent=27 // pred_fallthru
          _
        %p172 = scmp.lt.s32.totalorder %s23, 0
        %s173 = scalar_select %p172, %s23, 0
        %s174 = smul.addr %s173, 8
        %s175 = scalar_lea.vmem %s0, %s174
        %p176 = pneg %p52
        %p177 = pneg %p49
        %s178 = sand.u32 %s67, 1
        %s179 = scalar_lea.sflag [#allocation3], %s178
        %s180 = sand.u32 %s67, 1
        %s181 = smul.addr %s180, 8
        %s182 = scalar_lea.vmem [#allocation2], %s181
        %p183 = pneg %p80
        %p184 = pneg %p77
        %p185 = pneg %p108
        %p186 = pneg %p105
        %s187 = sand.u32 %s95, 1
        %s188 = scalar_lea.sflag [#allocation4], %s187
        %s189 = sand.u32 %s95, 1
        %s190 = smul.addr %s189, 8
        %s191 = scalar_lea.vmem [#allocation5], %s190
        %p192 = scmp.lt.s32.totalorder %s23, 0
        %s193 = scalar_select %p192, %s23, 0
        %s194 = smul.addr %s193, 8
        %s195 = scalar_lea.vmem %s0, %s194
        %v196 = vld [vmem:[%s195] sm:$0xff]
        %v197 = vld [vmem:[%s166] sm:$0xff]
        %199 = vset.pattern.permute.xlu0 0
        %200 = vperm.xlu0 %199, %v196
        %v201 = vpop.permute.xlu0 %200
        %v203 = vmul.f32 %v197, %v201
        %204 = vset.pattern.permute.xlu0 1
        %205 = vperm.xlu0 %204, %v196
        %v206 = vpop.permute.xlu0 %205
        %v208 = vadd.f32 %v203, %v206
        %209 = vst [vmem:[%s191] sm:$0xff] %v208
        %s210 = sand.u32 %s95, 1
        %s211 = scalar_lea.sflag [#allocation4], %s210
        %s212 = sand.u32 %s95, 1
        %s213 = smul.addr %s212, 8
        %s214 = scalar_lea.vmem [#allocation5], %s213
        // Predicated region
        $region33: #{tpu_custom_call.1} parent=27 // pred_check
          %p215 = pneg %p105
        $region34: #{tpu_custom_call.1} parent=27 // pred_check_branch
          %217 = sbr.rel (%p215) target = $region36
        $region35: #{tpu_custom_call.1} parent=27 // pred_region
          %219 = vsyncadd %s211, 0
          %s220 = smul.addr %s23, 2
          %s221 = sadd.s32 %s24, %s220
          %s222 = smul.addr %s221, 8
          %s223 = scalar_lea.hbm %s2, %s222
          %s225 = sshll.u32 %s214, 4
          %s226 = int_to_ptr.vmem [resolvable:$true] %s225
          %s227 = sshll.u32 %s223, 4
          %s228 = int_to_ptr.hbm [resolvable:$true] %s227
          %230 = dma.vmem_to_hbm [thread:$0]  %s226, 128, %s228, %s211
        $region36: #{tpu_custom_call.1} parent=27 // pred_fallthru
          _
      $region28: #{tpu_custom_call.1} parent=5 // pred_fallthru
        _
      %p231 = scmp.le.s32.totalorder 2, %s14
      // Predicated region
      $region37: #{tpu_custom_call.1} parent=5 // pred_check
        %p232 = pneg %p231
      $region38: #{tpu_custom_call.1} parent=5 // pred_check_branch
        %234 = sbr.rel (%p232) target = $region40
      $region39: #{tpu_custom_call.1} parent=5 // pred_region
        %s235 = ssub.s32 %s14, 2
        // Predicated region
        $region41: #{tpu_custom_call.1} parent=39 // pred_check
          %p236 = pneg %p111
        $region42: #{tpu_custom_call.1} parent=39 // pred_check_branch
          %238 = sbr.rel (%p236) target = $region44
        $region43: #{tpu_custom_call.1} parent=39 // pred_region
          %s239 = sand.u32 %s96, 1
          %s240 = scalar_lea.sflag [#allocation4], %s239
          %s241 = sand.u32 %s96, 1
          %s242 = smul.addr %s241, 8
          %s243 = scalar_lea.vmem [#allocation5], %s242
          %245 = dma.done %s240, 128
        $region44: #{tpu_custom_call.1} parent=39 // pred_fallthru
          _
      $region40: #{tpu_custom_call.1} parent=5 // pred_fallthru
        _
    $region6: #{tpu_custom_call.1} parent=1 // loop_footer
      %s18 = sadd.s32 1, %s14
    $region7: #{tpu_custom_call.1} parent=1 // loop_footer_branch
      %13 = sbr.rel target = $region3
    $region8: #{tpu_custom_call.1} parent=1 // loop_exit
      _
    %246 = vsyncpa [#allocation3], 1
    %s247 = scalar_lea.sflag [#allocation3], 1
    %248 = vsyncpa %s247, 1
    %249 = vsyncpa [#allocation4], 1
    %s250 = scalar_lea.sflag [#allocation4], 1
    %251 = vsyncpa %s250, 1

</llo_original>
